<compile_context>
chip_gen: v5e
topology: v5e:2x2
jax: 0.10.0
libtpu: 0.0.40
codegen_flags: <defaults>
</compile_context>

<pallas_src>
import jax
import jax.numpy as jnp
from jax.experimental import pallas as pl
from jax.experimental.pallas import tpu as pltpu


_TILE_BUDGET_BYTES = 4 << 20   # per x tile; ~16 MiB live with double buffering


def _largest_aligned_divisor(n, align, max_val):
    """Largest d <= max_val with d % align == 0 and n % d == 0, else None."""
    best = None
    d = align
    limit = min(n, max_val)
    while d <= limit:
        if n % d == 0:
            best = d
        d += align
    return best


def _vmem_limit_bytes(default=40 << 20):
    """Scoped VMEM limit: ~3/4 of physical when queryable, conservative otherwise."""
    try:
        info = pltpu.get_tpu_info()
        cap = getattr(info, "vmem_capacity_bytes", None)
        if cap:
            return int(min(cap * 3 // 4, 96 << 20))
    except Exception:
        pass
    return default


def _make_gate_kernel(hw_total):
    inv_hw = 1.0 / float(hw_total)

    def gate_kernel(x_ref, w1t_ref, b1_ref, w2t_ref, b2_ref, gate_ref, acc_ref):
        # x_ref: (1, C, hw_tile)   acc_ref: (1, C) f32   gate_ref: (1, 1, C) f32
        # w1t_ref: (C, C_red)  b1_ref: (1, C_red)  w2t_ref: (C_red, C)  b2_ref: (1, C)
        k = pl.program_id(1)

        @pl.when(k == 0)
        def _():
            acc_ref[...] = jnp.zeros_like(acc_ref)

        # f32 accumulation of the spatial sum without upcasting the whole tile.
        acc_ref[...] += jnp.sum(x_ref[...], axis=-1, dtype=jnp.float32)

        @pl.when(k == pl.num_programs(1) - 1)
        def _():
            pooled = acc_ref[...] * inv_hw                               # (1, C)
            h = jnp.dot(pooled, w1t_ref[...],
                        preferred_element_type=jnp.float32) + b1_ref[...]
            h = jnp.maximum(h, 0.0)                                      # (1, C_red)
            s = jnp.dot(h, w2t_ref[...],
                        preferred_element_type=jnp.float32) + b2_ref[...]
            s = jax.nn.sigmoid(s)                                        # (1, C)
            gate_ref[...] = s.reshape(gate_ref.shape)

    return gate_kernel


def _scale_kernel(x_ref, gate_ref, o_ref):
    # x_ref/o_ref: (row_tile, hw_tile); gate_ref: (row_tile, 1) f32
    g = gate_ref[...].astype(x_ref.dtype)        # multiply in native dtype
    o_ref[...] = x_ref[...] * g


def se_layer(x, w1, b1, w2, b2):
    """x: (B, C, H, W).  w1: (C//r, C), b1: (C//r,), w2: (C, C//r), b2: (C,)."""
    B, C, H, W = x.shape
    HW = H * W
    C_red = w1.shape[0]
    R = B * C
    itemsize = jnp.dtype(x.dtype).itemsize
    vmem_limit = _vmem_limit_bytes()

    # Lane-dense weight / bias layouts (rows, not columns).
    w1t = w1.T                      # (C, C_red)
    w2t = w2.T                      # (C_red, C)
    b1r = b1.reshape(1, C_red)
    b2r = b2.reshape(1, C)

    # -------- Pass 1: gate = sigmoid(W2 relu(W1 mean_hw(x) + b1) + b2) --------
    x3 = x.reshape(B, C, HW)
    max_hw_g = max(128, _TILE_BUDGET_BYTES // max(1, C * itemsize))
    hw_tile_g = _largest_aligned_divisor(HW, 128, max_hw_g) or HW
    n_hw_g = HW // hw_tile_g

    gate = pl.pallas_call(
        _make_gate_kernel(HW),
        out_shape=jax.ShapeDtypeStruct((B, 1, C), jnp.float32),
        grid_spec=pltpu.PrefetchScalarGridSpec(
            num_scalar_prefetch=0,
            grid=(B, n_hw_g),
            in_specs=[
                pl.BlockSpec((1, C, hw_tile_g), lambda b, k: (b, 0, k)),
                pl.BlockSpec((C, C_red), lambda b, k: (0, 0)),
                pl.BlockSpec((1, C_red), lambda b, k: (0, 0)),
                pl.BlockSpec((C_red, C), lambda b, k: (0, 0)),
                pl.BlockSpec((1, C), lambda b, k: (0, 0)),
            ],
            out_specs=pl.BlockSpec((1, 1, C), lambda b, k: (b, 0, 0)),
            scratch_shapes=[pltpu.VMEM((1, C), jnp.float32)],
        ),
        compiler_params=pltpu.CompilerParams(
            dimension_semantics=("parallel", "arbitrary"),
            vmem_limit_bytes=vmem_limit,
        ),
        cost_estimate=pl.CostEstimate(
            flops=int(B * C * HW + 4 * B * C * C_red),
            transcendentals=int(B * C),
            bytes_accessed=int(B * C * HW * itemsize
                               + 4 * (2 * C * C_red + C + C_red + 2 * B * C)),
        ),
    )(x3, w1t, b1r, w2t, b2r)

    # -------- Pass 2: out = x * gate (streaming, lane-dense tiles) --------
    x2 = x.reshape(R, HW)
    gate_col = gate.reshape(R, 1)

    max_hw = max(128, _TILE_BUDGET_BYTES // (8 * itemsize))
    hw_tile = _largest_aligned_divisor(HW, 128, max_hw) or HW
    max_rows = max(8, _TILE_BUDGET_BYTES // max(1, hw_tile * itemsize))
    row_tile = _largest_aligned_divisor(R, 8, max_rows) or R

    out2 = pl.pallas_call(
        _scale_kernel,
        out_shape=jax.ShapeDtypeStruct((R, HW), x.dtype),
        grid_spec=pltpu.PrefetchScalarGridSpec(
            num_scalar_prefetch=0,
            grid=(R // row_tile, HW // hw_tile),
            in_specs=[
                pl.BlockSpec((row_tile, hw_tile), lambda i, j: (i, j)),
                pl.BlockSpec((row_tile, 1), lambda i, j: (i, 0)),
            ],
            out_specs=pl.BlockSpec((row_tile, hw_tile), lambda i, j: (i, j)),
        ),
        compiler_params=pltpu.CompilerParams(
            dimension_semantics=("parallel", "parallel"),
            vmem_limit_bytes=vmem_limit,
        ),
        cost_estimate=pl.CostEstimate(
            flops=int(R * HW),
            transcendentals=0,
            bytes_accessed=int(2 * R * HW * itemsize + R * 4),
        ),
    )(x2, gate_col)

    return out2.reshape(B, C, H, W)


def se_layer_ref(x, w1, b1, w2, b2):
    """Pure-JAX reference matching the PyTorch forward."""
    y = jnp.mean(x, axis=(2, 3))                      # (B, C)
    y = jnp.maximum(y @ w1.T + b1, 0.0)               # (B, C//r)
    y = jax.nn.sigmoid(y @ w2.T + b2)                 # (B, C)
    return x * y[:, :, None, None]


if __name__ == "__main__":
    key = jax.random.PRNGKey(0)
    B, C, H, W = 2, 16, 16, 16
    reduction = 8
    C_red = C // reduction

    k_x, k_w1, k_b1, k_w2, k_b2 = jax.random.split(key, 5)
    x = jax.random.normal(k_x, (B, C, H, W), dtype=jnp.float32)
    # Synthetic params: nn.Linear(channel, channel//r), nn.Linear(channel//r, channel)
    w1 = jax.random.normal(k_w1, (C_red, C), dtype=jnp.float32) * 0.1
    b1 = jax.random.normal(k_b1, (C_red,), dtype=jnp.float32) * 0.1
    w2 = jax.random.normal(k_w2, (C, C_red), dtype=jnp.float32) * 0.1
    b2 = jax.random.normal(k_b2, (C,), dtype=jnp.float32) * 0.1

    se_fn = jax.jit(se_layer)
    out = se_fn(x, w1, b1, w2, b2)
    jax.block_until_ready(out)

    ref = se_layer_ref(x, w1, b1, w2, b2)
    assert out.shape == (B, C, H, W)
    assert jnp.allclose(out, ref, atol=1e-5, rtol=1e-5), "Pallas output mismatch vs reference"

    print("KERNEL_OK")
</pallas_src>

<mosaic_0001>
module attributes {stable_mosaic.version = 11 : i64} {
  func.func @gate_kernel(%arg0: i32, %arg1: i32, %arg2: memref<1x16x256xf32, #tpu.memory_space<vmem>>, %arg3: memref<16x2xf32, #tpu.memory_space<vmem>>, %arg4: memref<1x2xf32, #tpu.memory_space<vmem>>, %arg5: memref<2x16xf32, #tpu.memory_space<vmem>>, %arg6: memref<1x16xf32, #tpu.memory_space<vmem>>, %arg7: memref<1x1x16xf32, #tpu.memory_space<vmem>>, %arg8: memref<1x16xf32, #tpu.memory_space<vmem>>) attributes {dimension_semantics = [#tpu.dimension_semantics<parallel>, #tpu.dimension_semantics<arbitrary>], iteration_bounds = array<i64: 2, 1>, scalar_prefetch = 0 : i64, scratch_operands = 1 : i64, tpu.core_type = #tpu.core_type<tc>, window_params = [{transform_indices = @transform_0, window_bounds = array<i64: 1, 16, 256>}, {pipeline_mode = #tpu.pipeline_mode<synchronous>, transform_indices = @transform_1, window_bounds = array<i64: 16, 2>}, {pipeline_mode = #tpu.pipeline_mode<synchronous>, transform_indices = @transform_2, window_bounds = array<i64: 1, 2>}, {pipeline_mode = #tpu.pipeline_mode<synchronous>, transform_indices = @transform_3, window_bounds = array<i64: 2, 16>}, {pipeline_mode = #tpu.pipeline_mode<synchronous>, transform_indices = @transform_4, window_bounds = array<i64: 1, 16>}, {transform_indices = @transform_5, window_bounds = array<i64: 1, 1, 16>}]} {
    %c0_i32 = arith.constant 0 : i32
    %0 = arith.cmpi eq, %arg1, %c0_i32 : i32
    %1 = arith.extui %0 : i1 to i32
    %c0_i32_0 = arith.constant 0 : i32
    %2 = arith.cmpi ne, %1, %c0_i32_0 : i32
    scf.if %2 {
      %cst_9 = arith.constant 0.000000e+00 : f32
      %11 = vector.broadcast %cst_9 : f32 to vector<1x16xf32>
      %c0_10 = arith.constant 0 : index
      %c0_11 = arith.constant 0 : index
      %12 = vector.load %arg8[%c0_10, %c0_11] : memref<1x16xf32, #tpu.memory_space<vmem>>, vector<1x16xf32>
      tpu.vector_store %arg8[%c0_10, %c0_11], %11 {strides = array<i32>} : memref<1x16xf32, #tpu.memory_space<vmem>>, vector<1x16xf32>,
    } else {
    }
    %c0 = arith.constant 0 : index
    %c0_1 = arith.constant 0 : index
    %3 = vector.load %arg8[%c0, %c0_1] : memref<1x16xf32, #tpu.memory_space<vmem>>, vector<1x16xf32>
    %c0_2 = arith.constant 0 : index
    %c0_3 = arith.constant 0 : index
    %c0_4 = arith.constant 0 : index
    %4 = vector.load %arg2[%c0_2, %c0_3, %c0_4] : memref<1x16x256xf32, #tpu.memory_space<vmem>>, vector<1x16x256xf32>
    %cst = arith.constant dense<0.000000e+00> : vector<1x16xf32>
    %5 = vector.multi_reduction <add>, %4, %cst [2] : vector<1x16x256xf32> to vector<1x16xf32>
    %6 = arith.addf %3, %5 : vector<1x16xf32>
    %c0_5 = arith.constant 0 : index
    %c0_6 = arith.constant 0 : index
    %7 = vector.load %arg8[%c0_5, %c0_6] : memref<1x16xf32, #tpu.memory_space<vmem>>, vector<1x16xf32>
    tpu.vector_store %arg8[%c0_5, %c0_6], %6 {strides = array<i32>} : memref<1x16xf32, #tpu.memory_space<vmem>>, vector<1x16xf32>,
    %c0_i32_7 = arith.constant 0 : i32
    %8 = arith.cmpi eq, %arg1, %c0_i32_7 : i32
    %9 = arith.extui %8 : i1 to i32
    %c0_i32_8 = arith.constant 0 : i32
    %10 = arith.cmpi ne, %9, %c0_i32_8 : i32
    scf.if %10 {
      %c0_9 = arith.constant 0 : index
      %c0_10 = arith.constant 0 : index
      %11 = vector.load %arg8[%c0_9, %c0_10] : memref<1x16xf32, #tpu.memory_space<vmem>>, vector<1x16xf32>
      %cst_11 = arith.constant 3.906250e-03 : f32
      %12 = vector.broadcast %cst_11 : f32 to vector<1x16xf32>
      %13 = arith.mulf %11, %12 : vector<1x16xf32>
      %c0_12 = arith.constant 0 : index
      %c0_13 = arith.constant 0 : index
      %14 = vector.load %arg3[%c0_12, %c0_13] : memref<16x2xf32, #tpu.memory_space<vmem>>, vector<16x2xf32>
      %cst_14 = arith.constant dense<0.000000e+00> : vector<1x2xf32>
      %15 = tpu.matmul %13, %14, %cst_14 {dimension_numbers = #tpu.dot_dimension_numbers<[1], [0], [0], [1], [0, 0, 1, 1], [], []>} : vector<1x16xf32>, vector<16x2xf32>, vector<1x2xf32> -> vector<1x2xf32>
      %c0_15 = arith.constant 0 : index
      %c0_16 = arith.constant 0 : index
      %16 = vector.load %arg4[%c0_15, %c0_16] : memref<1x2xf32, #tpu.memory_space<vmem>>, vector<1x2xf32>
      %17 = arith.addf %15, %16 : vector<1x2xf32>
      %cst_17 = arith.constant 0.000000e+00 : f32
      %18 = vector.broadcast %cst_17 : f32 to vector<1x2xf32>
      %19 = arith.maximumf %17, %18 : vector<1x2xf32>
      %c0_18 = arith.constant 0 : index
      %c0_19 = arith.constant 0 : index
      %20 = vector.load %arg5[%c0_18, %c0_19] : memref<2x16xf32, #tpu.memory_space<vmem>>, vector<2x16xf32>
      %cst_20 = arith.constant dense<0.000000e+00> : vector<1x16xf32>
      %21 = tpu.matmul %19, %20, %cst_20 {dimension_numbers = #tpu.dot_dimension_numbers<[1], [0], [0], [1], [0, 0, 1, 1], [], []>} : vector<1x2xf32>, vector<2x16xf32>, vector<1x16xf32> -> vector<1x16xf32>
      %c0_21 = arith.constant 0 : index
      %c0_22 = arith.constant 0 : index
      %22 = vector.load %arg6[%c0_21, %c0_22] : memref<1x16xf32, #tpu.memory_space<vmem>>, vector<1x16xf32>
      %23 = arith.addf %21, %22 : vector<1x16xf32>
      %24 = arith.negf %23 : vector<1x16xf32>
      %25 = math.exp %24 : vector<1x16xf32>
      %cst_23 = arith.constant 1.000000e+00 : f32
      %26 = vector.broadcast %cst_23 : f32 to vector<1x16xf32>
      %27 = arith.addf %26, %25 : vector<1x16xf32>
      %28 = arith.divf %26, %27 : vector<1x16xf32>
      %29 = vector.shape_cast %28 : vector<1x16xf32> to vector<1x1x16xf32>
      %c0_24 = arith.constant 0 : index
      %c0_25 = arith.constant 0 : index
      %c0_26 = arith.constant 0 : index
      %30 = vector.load %arg7[%c0_24, %c0_25, %c0_26] : memref<1x1x16xf32, #tpu.memory_space<vmem>>, vector<1x1x16xf32>
      tpu.vector_store %arg7[%c0_24, %c0_25, %c0_26], %29 {strides = array<i32>} : memref<1x1x16xf32, #tpu.memory_space<vmem>>, vector<1x1x16xf32>,
    } else {
    }
    return
  }
  func.func @transform_0(%arg0: i32, %arg1: i32) -> (i32, i32, i32) {
    %c0_i32 = arith.constant 0 : i32
    %c0_i32_0 = arith.constant 0 : i32
    return %arg0, %c0_i32, %arg1 : i32, i32, i32
  }
  func.func @transform_1(%arg0: i32, %arg1: i32) -> (i32, i32) {
    %c0_i32 = arith.constant 0 : i32
    %c0_i32_0 = arith.constant 0 : i32
    %c0_i32_1 = arith.constant 0 : i32
    return %c0_i32, %c0_i32_0 : i32, i32
  }
  func.func @transform_2(%arg0: i32, %arg1: i32) -> (i32, i32) {
    %c0_i32 = arith.constant 0 : i32
    %c0_i32_0 = arith.constant 0 : i32
    %c0_i32_1 = arith.constant 0 : i32
    return %c0_i32, %c0_i32_0 : i32, i32
  }
  func.func @transform_3(%arg0: i32, %arg1: i32) -> (i32, i32) {
    %c0_i32 = arith.constant 0 : i32
    %c0_i32_0 = arith.constant 0 : i32
    %c0_i32_1 = arith.constant 0 : i32
    return %c0_i32, %c0_i32_0 : i32, i32
  }
  func.func @transform_4(%arg0: i32, %arg1: i32) -> (i32, i32) {
    %c0_i32 = arith.constant 0 : i32
    %c0_i32_0 = arith.constant 0 : i32
    %c0_i32_1 = arith.constant 0 : i32
    return %c0_i32, %c0_i32_0 : i32, i32
  }
  func.func @transform_5(%arg0: i32, %arg1: i32) -> (i32, i32, i32) {
    %c0_i32 = arith.constant 0 : i32
    %c0_i32_0 = arith.constant 0 : i32
    %c0_i32_1 = arith.constant 0 : i32
    return %arg0, %c0_i32, %c0_i32_0 : i32, i32, i32
  }
}

module attributes {stable_mosaic.version = 11 : i64} {
  func.func @_scale_kernel(%arg0: i32, %arg1: i32, %arg2: memref<32x256xf32, #tpu.memory_space<vmem>>, %arg3: memref<32x1xf32, #tpu.memory_space<vmem>>, %arg4: memref<32x256xf32, #tpu.memory_space<vmem>>) attributes {dimension_semantics = [#tpu.dimension_semantics<parallel>, #tpu.dimension_semantics<parallel>], iteration_bounds = array<i64: 1, 1>, scalar_prefetch = 0 : i64, scratch_operands = 0 : i64, tpu.core_type = #tpu.core_type<tc>, window_params = [{transform_indices = @transform_0, window_bounds = array<i64: 32, 256>}, {transform_indices = @transform_1, window_bounds = array<i64: 32, 1>}, {transform_indices = @transform_2, window_bounds = array<i64: 32, 256>}]} {
    %c0 = arith.constant 0 : index
    %c0_0 = arith.constant 0 : index
    %0 = vector.load %arg3[%c0, %c0_0] : memref<32x1xf32, #tpu.memory_space<vmem>>, vector<32x1xf32>
    %c0_1 = arith.constant 0 : index
    %c0_2 = arith.constant 0 : index
    %1 = vector.load %arg2[%c0_1, %c0_2] : memref<32x256xf32, #tpu.memory_space<vmem>>, vector<32x256xf32>
    %2 = vector.broadcast %0 : vector<32x1xf32> to vector<32x256xf32>
    %3 = arith.mulf %1, %2 : vector<32x256xf32>
    %c0_3 = arith.constant 0 : index
    %c0_4 = arith.constant 0 : index
    %4 = vector.load %arg4[%c0_3, %c0_4] : memref<32x256xf32, #tpu.memory_space<vmem>>, vector<32x256xf32>
    tpu.vector_store %arg4[%c0_3, %c0_4], %3 {strides = array<i32>} : memref<32x256xf32, #tpu.memory_space<vmem>>, vector<32x256xf32>,
    return
  }
  func.func @transform_0(%arg0: i32, %arg1: i32) -> (i32, i32) {
    %c0_i32 = arith.constant 0 : i32
    return %arg0, %arg1 : i32, i32
  }
  func.func @transform_1(%arg0: i32, %arg1: i32) -> (i32, i32) {
    %c0_i32 = arith.constant 0 : i32
    %c0_i32_0 = arith.constant 0 : i32
    return %arg0, %c0_i32 : i32, i32
  }
  func.func @transform_2(%arg0: i32, %arg1: i32) -> (i32, i32) {
    %c0_i32 = arith.constant 0 : i32
    return %arg0, %arg1 : i32, i32
  }
}

</mosaic_0001>

<llo_original>
// kernel: se_layer.3
$region0: #{se_layer.3}
  #allocation0 [shape = 'u32[]', space=smem, size = 0x4, offset = 0x4, fixed_abs, tag = 'smem constant byte address 0x4 - core index']
  #allocation1 [shape = 'u32[72,128]{1,0:T(1,128)}', space=vmem, size = 0x9000, scoped, tag = 'internal scratch']
  %s0 = inlined_call_operand.vmem [shape: f32[32,256], index: 0, kind: input, shape index: {}]
  %s1 = inlined_call_operand.vmem [shape: f32[32,1], index: 1, kind: input, shape index: {}]
  %s2 = inlined_call_operand.vmem [shape: f32[32,256], index: 2, kind: output, shape index: {}]
  %s3 = sld [smem:[#allocation0]]
  $region18: #{se_layer.3} parent=0
    _
  %s5 = ssub.s32 1, %s3
  %s6 = scalar_select 0, %s5, %s3
  // Predicated region
  $region2: #{se_layer.3} parent=0 // pred_check
    _
  $region3: #{se_layer.3} parent=0 // pred_check_branch
    %8 = sbr.rel (0) target = $region5
  $region4: #{se_layer.3} parent=0 // pred_region
    _
  $region5: #{se_layer.3} parent=0 // pred_fallthru
    _
  // Predicated region
  $region6: #{se_layer.3} parent=0 // pred_check
    _
  $region7: #{se_layer.3} parent=0 // pred_check_branch
    %10 = sbr.rel (0) target = $region9
  $region8: #{se_layer.3} parent=0 // pred_region
    _
  $region9: #{se_layer.3} parent=0 // pred_fallthru
    _
  %v11 = vld [vmem:[%s1] sm:$0xff]
  %v12 = vld [vmem:[%s1 + $0x8] sm:$0xff]
  %v13 = vld [vmem:[%s1 + $0x10] sm:$0xff]
  %v14 = vld [vmem:[%s1 + $0x18] sm:$0xff]
  %v15 = vld [vmem:[%s0] sm:$0xff]
  %v16 = vld [vmem:[%s0 + $0x8] sm:$0xff]
  %v17 = vld [vmem:[%s0 + $0x10] sm:$0xff]
  %v18 = vld [vmem:[%s0 + $0x18] sm:$0xff]
  %v19 = vld [vmem:[%s0 + $0x20] sm:$0xff]
  %v20 = vld [vmem:[%s0 + $0x28] sm:$0xff]
  %v21 = vld [vmem:[%s0 + $0x30] sm:$0xff]
  %v22 = vld [vmem:[%s0 + $0x38] sm:$0xff]
  %24 = vset.pattern.permute.xlu0 0
  %25 = vperm.xlu0 %24, %v11
  %v26 = vpop.permute.xlu0 %25
  %29 = vset.pattern.permute.xlu0 0
  %30 = vperm.xlu0 %29, %v12
  %v31 = vpop.permute.xlu0 %30
  %34 = vset.pattern.permute.xlu0 0
  %35 = vperm.xlu0 %34, %v13
  %v36 = vpop.permute.xlu0 %35
  %39 = vset.pattern.permute.xlu0 0
  %40 = vperm.xlu0 %39, %v14
  %v41 = vpop.permute.xlu0 %40
  %v43 = vmul.f32 %v15, %v26
  %v44 = vmul.f32 %v16, %v26
  %v45 = vmul.f32 %v17, %v31
  %v46 = vmul.f32 %v18, %v31
  %v47 = vmul.f32 %v19, %v36
  %v48 = vmul.f32 %v20, %v36
  %v49 = vmul.f32 %v21, %v41
  %v50 = vmul.f32 %v22, %v41
  %51 = vst [vmem:[%s2] sm:$0xff] %v43
  %52 = vst [vmem:[%s2 + $0x8] sm:$0xff] %v44
  %53 = vst [vmem:[%s2 + $0x10] sm:$0xff] %v45
  %54 = vst [vmem:[%s2 + $0x18] sm:$0xff] %v46
  %55 = vst [vmem:[%s2 + $0x20] sm:$0xff] %v47
  %56 = vst [vmem:[%s2 + $0x28] sm:$0xff] %v48
  %57 = vst [vmem:[%s2 + $0x30] sm:$0xff] %v49
  %58 = vst [vmem:[%s2 + $0x38] sm:$0xff] %v50
  // Predicated region
  $region10: #{se_layer.3} parent=0 // pred_check
    _
  $region11: #{se_layer.3} parent=0 // pred_check_branch
    %60 = sbr.rel (0) target = $region13
  $region12: #{se_layer.3} parent=0 // pred_region
    _
  $region13: #{se_layer.3} parent=0 // pred_fallthru
    _
  // Predicated region
  $region14: #{se_layer.3} parent=0 // pred_check
    _
  $region15: #{se_layer.3} parent=0 // pred_check_branch
    %62 = sbr.rel (0) target = $region17
  $region16: #{se_layer.3} parent=0 // pred_region
    _
  $region17: #{se_layer.3} parent=0 // pred_fallthru
    _

// kernel: se_layer.2
$region0: #{se_layer.2}
  #allocation0 [shape = 'u32[]', space=smem, size = 0x4, offset = 0x4, fixed_abs, tag = 'smem constant byte address 0x4 - core index']
  #allocation1 [shape = 'u32[72,128]{1,0:T(1,128)}', space=vmem, size = 0x9000, scoped, tag = 'internal scratch']
  #allocation2 [shape = 'f32[1,16]{1,0:T(1,128)}', space=vmem, size = 0x200, scoped, tag = 'scratch operand']
  %s0 = inlined_call_operand.vmem [shape: f32[2,16,256], index: 0, kind: input, shape index: {}]
  %s1 = inlined_call_operand.vmem [shape: f32[16,2], index: 1, kind: input, shape index: {}]
  %s2 = inlined_call_operand.vmem [shape: f32[1,2], index: 2, kind: input, shape index: {}]
  %s3 = inlined_call_operand.vmem [shape: f32[2,16], index: 3, kind: input, shape index: {}]
  %s4 = inlined_call_operand.vmem [shape: f32[1,16], index: 4, kind: input, shape index: {}]
  %s5 = inlined_call_operand.vmem [shape: f32[2,1,16], index: 5, kind: output, shape index: {}]
  %s6 = sld [smem:[#allocation0]]
  $region61: #{se_layer.2} parent=0
    _
  %s8 = ssub.s32 1, %s6
  %s9 = scalar_select 0, %s8, %s6
  loop: start=0, step=1, limit=4
  $region2: #{se_layer.2} parent=0 // loop_pre_header
    _
  $region3: #{se_layer.2} parent=0 // loop_header
    %s11 = sphi 0, %s15
    %p12 = scmp.ge.s32.totalorder %s11, 4
    %s18 = sphi 0, %s30
    %s19 = sphi 0, %s26
    %s20 = sphi 0, %s18
    %s21 = sphi 0, %s19
    %s22 = sphi 0, %s20
    %s23 = sphi 0, %s21
    %s35 = sphi 0, %s37
    %s38 = sphi 0, %s35
    %s39 = sphi 0, %s38
    %s55 = sphi 0, %s39
    %s59 = sphi 0, %s59
    %s61 = sphi 0, %s59
    %s62 = sphi 0, %s61
    %s76 = sphi 0, %s62
    %s80 = sphi 0, %s80
    %s82 = sphi 0, %s80
    %s83 = sphi 0, %s82
    %s97 = sphi 0, %s83
    %s101 = sphi 0, %s101
    %s103 = sphi 0, %s101
    %s104 = sphi 0, %s103
    %s118 = sphi 0, %s104
    %s122 = sphi 0, %s122
    %s124 = sphi 0, %s122
    %s125 = sphi 0, %s124
    %s139 = sphi 0, %s125
    %s145 = sphi 0, %s147
    %s148 = sphi 0, %s145
    %s149 = sphi 0, %s148
    %s165 = sphi 0, %s149
  $region4: #{se_layer.2} parent=0 // loop_header_branch
    %14 = sbr.rel (%p12) target = $region8
  $region5: #{se_layer.2} parent=0 // loop_body
    %s16 = ssub.s32 %s11, 1
    %s17 = ssub.s32 %s11, 2
    %s24 = sadd.s32 1, %s19
    %p25 = scmp.ge.s32.totalorder %s24, 1
    %s26 = scalar_select %p25, 0, %s24
    %s27 = sadd.s32 1, %s18
    %s28 = scalar_select %p25, %s27, %s18
    %p29 = scmp.ge.s32.totalorder %s28, 2
    %s30 = scalar_select %p29, 0, %s28
    %s31 = ssub.s32 %s18, %s30
    %s32 = ssub.s32 %s19, %s26
    %s33 = sor.u32 %s31, %s32
    %p34 = scmp.eq.s32.totalorder %s33, 0
    %s36 = sadd.s32 %s35, 1
    %s37 = scalar_select %p34, %s35, %s36
    %p40 = pneg %p34
    %p41 = scmp.eq.s32.totalorder %s11, 1
    %p42 = por %p40, %p41
    %p43 = scmp.ne.s32.totalorder %s35, %s38
    %p44 = scmp.eq.s32.totalorder %s11, 0
    %p45 = por %p43, %p44
    %p46 = scmp.ne.s32.totalorder %s35, %s38
    %p47 = scmp.eq.s32.totalorder %s16, 1
    %p48 = por %p46, %p47
    %p49 = scmp.ne.s32.totalorder %s38, %s39
    %p50 = scmp.eq.s32.totalorder %s16, 0
    %p51 = por %p49, %p50
    %p52 = scmp.ne.s32.totalorder %s38, %s39
    %p53 = scmp.eq.s32.totalorder %s17, 1
    %p54 = por %p52, %p53
    %p56 = scmp.ne.s32.totalorder %s39, %s55
    %p57 = scmp.eq.s32.totalorder %s17, 0
    %p58 = por %p56, %p57
    %s60 = sadd.s32 %s59, 1
    %p63 = scmp.eq.s32.totalorder %s11, 1
    %p64 = scmp.ne.s32.totalorder %s59, %s61
    %p65 = scmp.eq.s32.totalorder %s11, 0
    %p66 = por %p64, %p65
    %p67 = scmp.ne.s32.totalorder %s59, %s61
    %p68 = scmp.eq.s32.totalorder %s16, 1
    %p69 = por %p67, %p68
    %p70 = scmp.ne.s32.totalorder %s61, %s62
    %p71 = scmp.eq.s32.totalorder %s16, 0
    %p72 = por %p70, %p71
    %p73 = scmp.ne.s32.totalorder %s61, %s62
    %p74 = scmp.eq.s32.totalorder %s17, 1
    %p75 = por %p73, %p74
    %p77 = scmp.ne.s32.totalorder %s62, %s76
    %p78 = scmp.eq.s32.totalorder %s17, 0
    %p79 = por %p77, %p78
    %s81 = sadd.s32 %s80, 1
    %p84 = scmp.eq.s32.totalorder %s11, 1
    %p85 = scmp.ne.s32.totalorder %s80, %s82
    %p86 = scmp.eq.s32.totalorder %s11, 0
    %p87 = por %p85, %p86
    %p88 = scmp.ne.s32.totalorder %s80, %s82
    %p89 = scmp.eq.s32.totalorder %s16, 1
    %p90 = por %p88, %p89
    %p91 = scmp.ne.s32.totalorder %s82, %s83
    %p92 = scmp.eq.s32.totalorder %s16, 0
    %p93 = por %p91, %p92
    %p94 = scmp.ne.s32.totalorder %s82, %s83
    %p95 = scmp.eq.s32.totalorder %s17, 1
    %p96 = por %p94, %p95
    %p98 = scmp.ne.s32.totalorder %s83, %s97
    %p99 = scmp.eq.s32.totalorder %s17, 0
    %p100 = por %p98, %p99
    %s102 = sadd.s32 %s101, 1
    %p105 = scmp.eq.s32.totalorder %s11, 1
    %p106 = scmp.ne.s32.totalorder %s101, %s103
    %p107 = scmp.eq.s32.totalorder %s11, 0
    %p108 = por %p106, %p107
    %p109 = scmp.ne.s32.totalorder %s101, %s103
    %p110 = scmp.eq.s32.totalorder %s16, 1
    %p111 = por %p109, %p110
    %p112 = scmp.ne.s32.totalorder %s103, %s104
    %p113 = scmp.eq.s32.totalorder %s16, 0
    %p114 = por %p112, %p113
    %p115 = scmp.ne.s32.totalorder %s103, %s104
    %p116 = scmp.eq.s32.totalorder %s17, 1
    %p117 = por %p115, %p116
    %p119 = scmp.ne.s32.totalorder %s104, %s118
    %p120 = scmp.eq.s32.totalorder %s17, 0
    %p121 = por %p119, %p120
    %s123 = sadd.s32 %s122, 1
    %p126 = scmp.eq.s32.totalorder %s11, 1
    %p127 = scmp.ne.s32.totalorder %s122, %s124
    %p128 = scmp.eq.s32.totalorder %s11, 0
    %p129 = por %p127, %p128
    %p130 = scmp.ne.s32.totalorder %s122, %s124
    %p131 = scmp.eq.s32.totalorder %s16, 1
    %p132 = por %p130, %p131
    %p133 = scmp.ne.s32.totalorder %s124, %s125
    %p134 = scmp.eq.s32.totalorder %s16, 0
    %p135 = por %p133, %p134
    %p136 = scmp.ne.s32.totalorder %s124, %s125
    %p137 = scmp.eq.s32.totalorder %s17, 1
    %p138 = por %p136, %p137
    %p140 = scmp.ne.s32.totalorder %s125, %s139
    %p141 = scmp.eq.s32.totalorder %s17, 0
    %p142 = por %p140, %p141
    %s143 = ssub.s32 %s18, %s30
    %p144 = scmp.eq.s32.totalorder %s143, 0
    %s146 = sadd.s32 %s145, 1
    %s147 = scalar_select %p144, %s145, %s146
    %p150 = pneg %p144
    %p151 = scmp.eq.s32.totalorder %s11, 1
    %p152 = por %p150, %p151
    %p153 = scmp.ne.s32.totalorder %s145, %s148
    %p154 = scmp.eq.s32.totalorder %s11, 0
    %p155 = por %p153, %p154
    %p156 = scmp.ne.s32.totalorder %s145, %s148
    %p157 = scmp.eq.s32.totalorder %s16, 1
    %p158 = por %p156, %p157
    %p159 = scmp.ne.s32.totalorder %s148, %s149
    %p160 = scmp.eq.s32.totalorder %s16, 0
    %p161 = por %p159, %p160
    %p162 = scmp.ne.s32.totalorder %s148, %s149
    %p163 = scmp.eq.s32.totalorder %s17, 1
    %p164 = por %p162, %p163
    %p166 = scmp.ne.s32.totalorder %s149, %s165
    %p167 = scmp.eq.s32.totalorder %s17, 0
    %p168 = por %p166, %p167
    %p169 = scmp.le.s32.totalorder 1, %s11
    %p170 = scmp.lt.s32.totalorder %s11, 3
    %p171 = pnand %p169, %p170
    %p172 = pneg %p171
    // Predicated region
    $region9: #{se_layer.2} parent=5 // pred_check
      _
    $region10: #{se_layer.2} parent=5 // pred_check_branch
      %174 = sbr.rel (%p171) target = $region12
    $region11: #{se_layer.2} parent=5 // pred_region
      %s175 = ssub.s32 %s11, 1
      // Predicated region
      $region13: #{se_layer.2} parent=11 // pred_check
        %p176 = pneg %p72
      $region14: #{se_layer.2} parent=11 // pred_check_branch
        %178 = sbr.rel (%p176) target = $region16
      $region15: #{se_layer.2} parent=11 // pred_region
        _
      $region16: #{se_layer.2} parent=11 // pred_fallthru
        _
      // Predicated region
      $region17: #{se_layer.2} parent=11 // pred_check
        %p179 = pneg %p93
      $region18: #{se_layer.2} parent=11 // pred_check_branch
        %181 = sbr.rel (%p179) target = $region20
      $region19: #{se_layer.2} parent=11 // pred_region
        _
      $region20: #{se_layer.2} parent=11 // pred_fallthru
        _
      // Predicated region
      $region21: #{se_layer.2} parent=11 // pred_check
        %p182 = pneg %p114
      $region22: #{se_layer.2} parent=11 // pred_check_branch
        %184 = sbr.rel (%p182) target = $region24
      $region23: #{se_layer.2} parent=11 // pred_region
        _
      $region24: #{se_layer.2} parent=11 // pred_fallthru
        _
      // Predicated region
      $region25: #{se_layer.2} parent=11 // pred_check
        %p185 = pneg %p135
      $region26: #{se_layer.2} parent=11 // pred_check_branch
        %187 = sbr.rel (%p185) target = $region28
      $region27: #{se_layer.2} parent=11 // pred_region
        _
      $region28: #{se_layer.2} parent=11 // pred_fallthru
        _
    $region12: #{se_layer.2} parent=5 // pred_fallthru
      _
    %p188 = scmp.lt.s32.totalorder %s11, 2
    // Predicated region
    $region29: #{se_layer.2} parent=5 // pred_check
      %p189 = pneg %p188
    $region30: #{se_layer.2} parent=5 // pred_check_branch
      %191 = sbr.rel (%p189) target = $region32
    $region31: #{se_layer.2} parent=5 // pred_region
      // Predicated region
      $region33: #{se_layer.2} parent=31 // pred_check
        %p192 = pneg %p45
      $region34: #{se_layer.2} parent=31 // pred_check_branch
        %194 = sbr.rel (%p192) target = $region36
      $region35: #{se_layer.2} parent=31 // pred_region
        %s195 = smul.u32 2, %s19
        %p196 = scmp.lt.s32.totalorder %s18, 1
        %s197 = scalar_select %p196, %s18, 1
        %p198 = scmp.lt.s32.totalorder %s195, 1
        %s199 = scalar_select %p198, %s195, 1
        %s200 = smul.addr %s197, 4
        %s201 = sadd.s32 %s199, %s200
        %s202 = smul.addr %s201, 8
        %s203 = scalar_lea.vmem %s0, %s202
        %s204 = smul.u32 2, %s19
      $region36: #{se_layer.2} parent=31 // pred_fallthru
        _
    $region32: #{se_layer.2} parent=5 // pred_fallthru
      _
    %p205 = scmp.le.s32.totalorder 1, %s11
    %p206 = scmp.lt.s32.totalorder %s11, 3
    %p207 = pnand %p205, %p206
    %p208 = pneg %p207
    // Predicated region
    $region37: #{se_layer.2} parent=5 // pred_check
      _
    $region38: #{se_layer.2} parent=5 // pred_check_branch
      %210 = sbr.rel (%p207) target = $region40
    $region39: #{se_layer.2} parent=5 // pred_region
      %s211 = ssub.s32 %s11, 1
      %s212 = smul.u32 2, %s21
      %p213 = scmp.lt.s32.totalorder %s20, 1
      %s214 = scalar_select %p213, %s20, 1
      %p215 = scmp.lt.s32.totalorder %s212, 1
      %s216 = scalar_select %p215, %s212, 1
      %s217 = smul.addr %s214, 4
      %s218 = sadd.s32 %s216, %s217
      %s219 = smul.addr %s218, 8
      %s220 = scalar_lea.vmem %s0, %s219
      %p221 = pneg %p51
      %p222 = pneg %p48
      %p223 = pneg %p72
      %p224 = pneg %p69
      %p225 = pneg %p93
      %p226 = pneg %p90
      %p227 = pneg %p114
      %p228 = pneg %p111
      %p229 = pneg %p135
      %p230 = pneg %p132
      %p231 = pneg %p161
      %p232 = pneg %p158
      %p233 = scmp.lt.s32.totalorder %s20, 1
      %s234 = scalar_select %p233, %s20, 1
      %s235 = scalar_lea.vmem %s5, %s234
      %s236 = smul.u32 2, %s21
      %p237 = scmp.lt.s32.totalorder %s20, 1
      %s238 = scalar_select %p237, %s20, 1
      %p239 = scmp.lt.s32.totalorder %s236, 1
      %s240 = scalar_select %p239, %s236, 1
      %s241 = smul.addr %s238, 4
      %s242 = sadd.s32 %s240, %s241
      %s243 = smul.addr %s242, 8
      %s244 = scalar_lea.vmem %s0, %s243
      %s245 = smul.u32 2, %s21
      %p246 = scmp.lt.s32.totalorder %s20, 1
      %s247 = scalar_select %p246, %s20, 1
      %s248 = scalar_lea.vmem %s5, %s247
      %p249 = scmp.eq.s32.totalorder %s21, 0
      // Predicated region
      $region41: #{se_layer.2} parent=39 // pred_check
        %p250 = pneg %p249
      $region42: #{se_layer.2} parent=39 // pred_check_branch
        %252 = sbr.rel (%p250) target = $region44
      $region43: #{se_layer.2} parent=39 // pred_region
        %vm253 = vcmask 122880
        %254 = vst.msk [vmem:[#allocation2] sm:$0x1] %vm253, 0.0
      $region44: #{se_layer.2} parent=39 // pred_fallthru
        _
      %v255 = vld [vmem:[#allocation2] sm:$0x1]
      %v256 = vld [vmem:[%s244] sm:$0xff]
      %v257 = vld [vmem:[%s244 + $0x8] sm:$0xff]
      %v258 = vld [vmem:[%s244 + $0x10] sm:$0xff]
      %v259 = vld [vmem:[%s244 + $0x18] sm:$0xff]
      %v260 = vadd.f32 %v256, %v257
      %261 = vadd.xlane.f32.xlu0 %v260
      %v262 = vpop.xlane.xlu0 %261
      %v263 = vadd.f32 %v258, %v259
      %264 = vadd.xlane.f32.xlu0 %v263
      %v265 = vpop.xlane.xlu0 %264
      %v268 = vperm.slane %v262, 0
      %v269 = vperm.slane %v262, 1
      %v270 = vperm.slane %v262, 2
      %v271 = vperm.slane %v262, 3
      %v272 = vperm.slane %v262, 4
      %v273 = vperm.slane %v262, 5
      %v274 = vperm.slane %v262, 6
      %v275 = vperm.slane %v262, 7
      %v276 = vperm.slane %v265, 0
      %v277 = vperm.slane %v265, 1
      %v278 = vperm.slane %v265, 2
      %v279 = vperm.slane %v265, 3
      %v280 = vperm.slane %v265, 4
      %v281 = vperm.slane %v265, 5
      %v282 = vperm.slane %v265, 6
      %v283 = vperm.slane %v265, 7
      %284 = vst [vmem:[#allocation1] ss:$9 sm:$0xff] %v268
      %s285 = scalar_lea.vmem [#allocation1], 1
      %286 = vst [vmem:[%s285] ss:$9 sm:$0xff] %v269
      %s287 = scalar_lea.vmem [#allocation1], 2
      %288 = vst [vmem:[%s287] ss:$9 sm:$0xff] %v270
      %s289 = scalar_lea.vmem [#allocation1], 3
      %290 = vst [vmem:[%s289] ss:$9 sm:$0xff] %v271
      %s291 = scalar_lea.vmem [#allocation1], 4
      %292 = vst [vmem:[%s291] ss:$9 sm:$0xff] %v272
      %s293 = scalar_lea.vmem [#allocation1], 5
      %294 = vst [vmem:[%s293] ss:$9 sm:$0xff] %v273
      %s295 = scalar_lea.vmem [#allocation1], 6
      %296 = vst [vmem:[%s295] ss:$9 sm:$0xff] %v274
      %s297 = scalar_lea.vmem [#allocation1], 7
      %298 = vst [vmem:[%s297] ss:$9 sm:$0xff] %v275
      %v299 = vld [vmem:[#allocation1] sm:$0xff]
      %300 = vst [vmem:[#allocation1] ss:$9 sm:$0xff] %v276
      %301 = vst [vmem:[%s285] ss:$9 sm:$0xff] %v277
      %302 = vst [vmem:[%s287] ss:$9 sm:$0xff] %v278
      %303 = vst [vmem:[%s289] ss:$9 sm:$0xff] %v279
      %304 = vst [vmem:[%s291] ss:$9 sm:$0xff] %v280
      %305 = vst [vmem:[%s293] ss:$9 sm:$0xff] %v281
      %306 = vst [vmem:[%s295] ss:$9 sm:$0xff] %v282
      %307 = vst [vmem:[%s297] ss:$9 sm:$0xff] %v283
      %v308 = vld [vmem:[#allocation1] sm:$0xff]
      %309 = vset.pattern.permute.xlu0 0
      %310 = vperm.xlu0 %309, %v299
      %v311 = vpop.permute.xlu0 %310
      %312 = vset.pattern.permute.xlu0 0
      %313 = vperm.xlu0 %312, %v308
      %v314 = vpop.permute.xlu0 %313
      %v315 = vlaneseq
      %v316 = vand.u32 %v315, 127
      %v317 = vperm.slane %v311, %v316
      %v318 = vadd.s32 %v316, 4294967288
      %v319 = vperm.slane %v314, %v318
      %vm320 = vcmask 130112
      %v321 = vsel %vm320, %v319, %v317
      %v323 = vadd.f32 %v255, %v321
      %vm324 = vcmask 122880
      %325 = vst.msk [vmem:[#allocation2] sm:$0x1] %vm324, %v323
      // Predicated region
      $region45: #{se_layer.2} parent=39 // pred_check
        %p326 = pneg %p249
      $region46: #{se_layer.2} parent=39 // pred_check_branch
        %328 = sbr.rel (%p326) target = $region48
      $region47: #{se_layer.2} parent=39 // pred_region
        %v329 = vld [vmem:[#allocation2] sm:$0x1]
        %v330 = vmul.f32 %v329, 0.00390625
        %v331 = vld [vmem:[%s1] sm:$0xff]
        %v332 = vld [vmem:[%s1 + $0x8] sm:$0xff]
        %v333 = vld [vmem:[%s2] sm:$0x1]
        %vm334 = vcmask 130048
        %v336 = vsel %vm334, %v330, 0
        %338 = vmatpush.msra.mxu0 0.0
        %339 = vmatpush.msra.mxu0 0.0
        %340 = vmatpush.msra.mxu0 0.0
        %341 = vmatpush.msra.mxu0 0.0
        %342 = vmatpush.msra.mxu0 0.0
        %343 = vmatpush.msra.mxu0 0.0
        %344 = vmatpush.msra.mxu0 0.0
        %345 = vmatpush.msra.mxu0 0.0
        %346 = vmatpush.msra.mxu0 0.0
        %347 = vmatpush.msra.mxu0 0.0
        %348 = vmatpush.msra.mxu0 0.0
        %349 = vmatpush.msra.mxu0 0.0
        %350 = vmatpush.msra.mxu0 0.0
        %351 = vmatpush.msra.mxu0 0.0
        %352 = vmatpush.msra.mxu0 %v332
        %353 = vmatpush.msra.mxu0 %v331
        %354 = vmatmul.f32.gmra.mxu0 %v336
        %v355 = vpop.f32.mrf.mxu0
        %v356 = vadd.f32 %v333, %v355
        %357 = vdwg.mxu0
        %v358 = vmax.f32 %v356, 0.0
        %v359 = vld [vmem:[%s3] sm:$0x3]
        %v360 = vld [vmem:[%s4] sm:$0x1]
        %vm361 = vcmask 15360
        %v363 = vsel %vm361, %v358, 0
        %vm365 = vcmask 1041408
        %v367 = vsel %vm365, %v359, 0
        %369 = vmatpush.msra.mxu0 0.0
        %370 = vmatpush.msra.mxu0 0.0
        %371 = vmatpush.msra.mxu0 0.0
        %372 = vmatpush.msra.mxu0 0.0
        %373 = vmatpush.msra.mxu0 0.0
        %374 = vmatpush.msra.mxu0 0.0
        %375 = vmatpush.msra.mxu0 0.0
        %376 = vmatpush.msra.mxu0 0.0
        %377 = vmatpush.msra.mxu0 0.0
        %378 = vmatpush.msra.mxu0 0.0
        %379 = vmatpush.msra.mxu0 0.0
        %380 = vmatpush.msra.mxu0 0.0
        %381 = vmatpush.msra.mxu0 0.0
        %382 = vmatpush.msra.mxu0 0.0
        %383 = vmatpush.msra.mxu0 0.0
        %384 = vmatpush.msra.mxu0 %v367
        %385 = vmatmul.f32.gmra.mxu0 %v363
        %v386 = vpop.f32.mrf.mxu0
        %v387 = vadd.f32 %v360, %v386
        %388 = vdwg.mxu0
        %v389 = vxor.u32 %v387, 2147483648
        %v390 = vmul.f32 %v389, 1.442695
        %v391 = vpow.pop %v390
        %v392 = vadd.f32 %v391, 1.0
        %v393 = vrcp.pop %v392
        %v394 = vmul.f32 %v392, %v393
        %v395 = vsub.f32 1.0, %v394
        %v396 = vmul.f32 %v393, %v395
        %v397 = vadd.f32 %v393, %v396
        %vm398 = vweird.f32 %v392
        %vm399 = vweird.f32 %v393
        %vm400 = vmor %vm398, %vm399
        %v401 = vsel %vm400, %v393, %v397
        %v402 = vand.u32 2147483647, %v392
        %vm403 = vcmp.eq.f32.partialorder %v402, 8.507059e+37
        %v404 = vand.u32 %v392, 2147483648
        %v405 = vor.u32 1.1754944e-38, %v404
        %v406 = vsel %vm403, %v405, %v401
        %v407 = vmul.f32 1.0, %v406
        %408 = vst.msk [vmem:[%s248] sm:$0x1] %vm324, %v407
      $region48: #{se_layer.2} parent=39 // pred_fallthru
        _
      %p409 = scmp.lt.s32.totalorder %s20, 1
      %s410 = scalar_select %p409, %s20, 1
      %s411 = scalar_lea.vmem %s5, %s410
      // Predicated region
      $region49: #{se_layer.2} parent=39 // pred_check
        %p412 = pneg %p158
      $region50: #{se_layer.2} parent=39 // pred_check_branch
        %414 = sbr.rel (%p412) target = $region52
      $region51: #{se_layer.2} parent=39 // pred_region
        _
      $region52: #{se_layer.2} parent=39 // pred_fallthru
        _
    $region40: #{se_layer.2} parent=5 // pred_fallthru
      _
    %p415 = scmp.le.s32.totalorder 2, %s11
    // Predicated region
    $region53: #{se_layer.2} parent=5 // pred_check
      %p416 = pneg %p415
    $region54: #{se_layer.2} parent=5 // pred_check_branch
      %418 = sbr.rel (%p416) target = $region56
    $region55: #{se_layer.2} parent=5 // pred_region
      %s419 = ssub.s32 %s11, 2
      // Predicated region
      $region57: #{se_layer.2} parent=55 // pred_check
        %p420 = pneg %p164
      $region58: #{se_layer.2} parent=55 // pred_check_branch
        %422 = sbr.rel (%p420) target = $region60
      $region59: #{se_layer.2} parent=55 // pred_region
        %p423 = scmp.lt.s32.totalorder %s22, 1
        %s424 = scalar_select %p423, %s22, 1
        %s425 = scalar_lea.vmem %s5, %s424
      $region60: #{se_layer.2} parent=55 // pred_fallthru
        _
    $region56: #{se_layer.2} parent=5 // pred_fallthru
      _
  $region6: #{se_layer.2} parent=0 // loop_footer
    %s15 = sadd.s32 1, %s11
  $region7: #{se_layer.2} parent=0 // loop_footer_branch
    %10 = sbr.rel target = $region3
  $region8: #{se_layer.2} parent=0 // loop_exit
    _

</llo_original>
